<compile_context>
chip_gen: v7x
topology: tpu7x:2x2x1
jax: 0.10.0
libtpu: 0.0.40
codegen_flags: <defaults>
</compile_context>

<pallas_src>
import numpy as np
import jax
import jax.numpy as jnp
from jax.experimental import pallas as pl
from jax.experimental.pallas import tpu as pltpu

KERNEL_SIZE = 3
STRIDE = 2


# --------------------------------------------------------------------------- #
# Kernel
# --------------------------------------------------------------------------- #
def _time_reduction_kernel(x_ref, c_ref, b_ref, o_ref):
    """x_ref : (BB, Th, 2D)      paired time rows (pair p = [x[2p], x[2p+1]])
       c_ref : (2, 2D, D_out)    C0 (pair t) and C1 (pair t+1) placement matrices
       b_ref : (1,) SMEM         conv bias scalar
       o_ref : (BB, T_out, D_out)
       Output row t uses input pairs t and t+1 (i.e. x rows 2t, 2t+1, 2t+2)."""
    n_b = x_ref.shape[0]
    t_out = o_ref.shape[1]
    c_dt = c_ref.dtype
    c0 = c_ref[0]                       # (2D, D_out), loaded once per grid step
    c1 = c_ref[1]
    bias = b_ref[0]
    prec = jax.lax.Precision.HIGHEST if c_dt == jnp.float32 else None

    def body(i, carry):
        rows0 = x_ref[i, pl.ds(0, t_out), :]      # pairs t     -> x[2t], x[2t+1]
        rows1 = x_ref[i, pl.ds(1, t_out), :]      # pairs t + 1 -> x[2t+2]
        if rows0.dtype != c_dt:                   # trace-time check: at most 2 casts
            rows0 = rows0.astype(c_dt)
            rows1 = rows1.astype(c_dt)
        acc = jnp.dot(rows0, c0, preferred_element_type=jnp.float32, precision=prec)
        acc = acc + jnp.dot(rows1, c1, preferred_element_type=jnp.float32, precision=prec)
        z = acc + bias                                           # f32
        o_ref[i] = (z * jax.nn.sigmoid(z)).astype(o_ref.dtype)   # Swish (f32 EUP)
        return carry

    jax.lax.fori_loop(0, n_b, body, 0)


# --------------------------------------------------------------------------- #
# Parameter preparation (host side, once)
# --------------------------------------------------------------------------- #
def prepare_time_reduction_params(weight, bias, feature_dim, compute_dtype=jnp.bfloat16):
    """Build the two weight-placement matrices C[0], C[1] of shape (2D, D_out).

    With x2[b, p, 0:D] = x[b, 2p], x2[b, p, D:2D] = x[b, 2p+1]:
      y[t, j] = x2[t]   @ C0[:, j]  +  x2[t+1] @ C1[:, j]  + bias
      C0[2j+kw, j]     = w[0, kw]   (time row 2t)
      C0[D+2j+kw, j]   = w[1, kw]   (time row 2t+1)
      C1[2j+kw, j]     = w[2, kw]   (time row 2t+2);  C1[D:, :] = 0
    """
    D = int(feature_dim)
    D_out = (D - KERNEL_SIZE) // STRIDE + 1
    w = np.asarray(jax.device_get(weight), np.float32)
    assert w.shape == (KERNEL_SIZE, KERNEL_SIZE)

    j = np.arange(D_out)
    c = np.zeros((2, 2 * D, D_out), np.float32)
    for kw in range(KERNEL_SIZE):
        cols = 2 * j + kw                       # input feature column for output j
        c[0, cols, j] = w[0, kw]
        c[0, D + cols, j] = w[1, kw]
        c[1, cols, j] = w[2, kw]

    c_mat = jnp.asarray(c, compute_dtype)
    b_arr = jnp.asarray(np.asarray(jax.device_get(bias), np.float32).reshape((1,)))
    return c_mat, b_arr


# --------------------------------------------------------------------------- #
# Wrapper
# --------------------------------------------------------------------------- #
def _vmem_capacity_bytes():
    try:
        info = pltpu.get_tpu_info()
        cap = getattr(info, "vmem_capacity_bytes", None)
        if cap:
            return int(cap)
    except Exception:
        pass
    return 64 << 20          # conservative fallback: v7x physical VMEM


def time_reduction_apply(x, input_lengths, c_mat, b_arr):
    """x: (B, T, D); c_mat/b_arr from prepare_time_reduction_params.
    Feed x in bf16 (with bf16 c_mat) for the fast, memory-bound path."""
    B, T, D = x.shape
    assert T >= KERNEL_SIZE and D >= KERNEL_SIZE
    T_out = (T - KERNEL_SIZE) // STRIDE + 1
    D_out = (D - KERNEL_SIZE) // STRIDE + 1
    assert c_mat.shape == (2, 2 * D, D_out), (c_mat.shape, (2, 2 * D, D_out))

    # Pair consecutive time rows into one lane-dense row: a free row-major bitcast.
    # (For odd T we pad one zero row; the padded row never reaches a kept output.)
    if T % 2:
        x = jnp.pad(x, ((0, 0), (0, 1), (0, 0)))
    Th = x.shape[1] // 2
    x2 = x.reshape(B, Th, 2 * D)

    x_item = jnp.dtype(x.dtype).itemsize
    c_bytes = c_mat.size * jnp.dtype(c_mat.dtype).itemsize

    # ---- generation-aware VMEM budget and batch-block size ------------------- #
    cap = _vmem_capacity_bytes()                       # 128 MiB v5e/v6e, 64 MiB v7x
    budget = max(min(cap * 3 // 4, cap - (16 << 20)), 8 << 20)

    def fits(bb):
        x_blk = bb * Th * 2 * D * x_item
        o_blk = bb * T_out * D_out * x_item
        acc_scratch = 2 * T_out * D_out * 4            # one live f32 acc + epilogue
        # x/out blocks are double-buffered by the pipeline; C is also 2x buffered.
        return 2 * (x_blk + o_blk) + 2 * c_bytes + acc_scratch + (2 << 20) <= budget

    divisors = [d for d in range(min(B, 8), 0, -1) if B % d == 0]
    fitting = [d for d in divisors if fits(d)] or [1]
    multi_step = [d for d in fitting if B // d >= 2]   # keep both v7x cores busy
    BB = multi_step[0] if multi_step else fitting[0]

    cost = pl.CostEstimate(
        flops=2 * B * T_out * 2 * (2 * D) * D_out,     # two (T_out,2D)x(2D,D_out) per batch
        transcendentals=B * T_out * D_out,
        bytes_accessed=x2.size * x_item + c_bytes + B * T_out * D_out * x_item,
    )

    out = pl.pallas_call(
        _time_reduction_kernel,
        out_shape=jax.ShapeDtypeStruct((B, T_out, D_out), x.dtype),
        grid_spec=pltpu.PrefetchScalarGridSpec(
            num_scalar_prefetch=0,
            grid=(B // BB,),
            in_specs=[
                pl.BlockSpec((BB, Th, 2 * D), lambda b: (b, 0, 0)),     # paired x rows
                pl.BlockSpec((2, 2 * D, D_out), lambda b: (0, 0, 0)),   # constant C0/C1
                pl.BlockSpec(memory_space=pltpu.MemorySpace.SMEM),      # bias scalar
            ],
            out_specs=pl.BlockSpec((BB, T_out, D_out), lambda b: (b, 0, 0)),
        ),
        compiler_params=pltpu.CompilerParams(
            dimension_semantics=("parallel",),
            vmem_limit_bytes=int(budget),
        ),
        cost_estimate=cost,
    )(x2, c_mat, b_arr)

    # Matches the PyTorch module exactly (including its behaviour for odd lengths).
    output_lengths = (input_lengths >> 1) - 1
    return out, output_lengths


def time_reduction_layer(x, input_lengths, weight, bias, compute_dtype=jnp.bfloat16):
    """Convenience wrapper matching the PyTorch module's forward signature."""
    c_mat, b_arr = prepare_time_reduction_params(weight, bias, x.shape[-1], compute_dtype)
    return time_reduction_apply(x, input_lengths, c_mat, b_arr)


# --------------------------------------------------------------------------- #
# Pure-JAX reference mirroring the PyTorch forward
# --------------------------------------------------------------------------- #
def _reference(x, input_lengths, weight, bias):
    y = jax.lax.conv_general_dilated(
        x[:, None, :, :].astype(jnp.float32),
        jnp.asarray(weight, jnp.float32)[None, None, :, :],
        window_strides=(STRIDE, STRIDE), padding="VALID",
        dimension_numbers=("NCHW", "OIHW", "NCHW"),
    ) + jnp.asarray(bias, jnp.float32)                 # (B, 1, T_out, D_out)
    y = y * jax.nn.sigmoid(y)                          # Swish
    B, C, T_out, D_out = y.shape
    y = jnp.transpose(y, (0, 2, 1, 3)).reshape(B, T_out, C * D_out)
    return y, (input_lengths >> 1) - 1


if __name__ == "__main__":
    key = jax.random.PRNGKey(0)
    k_x, k_w, k_b = jax.random.split(key, 3)

    B, T, D = 2, 16, 16
    x = jax.random.normal(k_x, (B, T, D), jnp.float32)
    input_lengths = jnp.array([16, 12], jnp.int32)

    # Conv2d(1, 1, 3, 3) params: weight (3, 3), bias ()
    fan_in = 1 * KERNEL_SIZE * KERNEL_SIZE
    bound = 1.0 / np.sqrt(fan_in)
    weight = jax.random.uniform(k_w, (KERNEL_SIZE, KERNEL_SIZE), jnp.float32, -bound, bound)
    bias = jax.random.uniform(k_b, (), jnp.float32, -bound, bound)

    ref_out, ref_lens = _reference(x, input_lengths, weight, bias)

    # ---- f32-operand path (Precision.HIGHEST on the MXU) ----
    c32, b32 = prepare_time_reduction_params(weight, bias, D, jnp.float32)
    out32, lens32 = time_reduction_apply(x, input_lengths, c32, b32)
    out32, lens32 = jax.block_until_ready((out32, lens32))
    assert out32.shape == ref_out.shape, (out32.shape, ref_out.shape)
    assert np.allclose(np.asarray(out32), np.asarray(ref_out), atol=2e-2, rtol=2e-2)
    assert np.array_equal(np.asarray(lens32), np.asarray(ref_lens))

    # ---- bf16 activations + bf16 C (recommended fast path), f32 accumulate ----
    cbf, bbf = prepare_time_reduction_params(weight, bias, D, jnp.bfloat16)
    outbf, _ = time_reduction_apply(x.astype(jnp.bfloat16), input_lengths, cbf, bbf)
    outbf = jax.block_until_ready(outbf)
    assert outbf.shape == ref_out.shape
    assert np.allclose(np.asarray(outbf.astype(jnp.float32)), np.asarray(ref_out),
                       atol=5e-2, rtol=5e-2)

    # ---- odd-T path (wrapper pads one row; pad never reaches a kept output) ----
    x_odd = x[:, :15, :]
    ref_odd, _ = _reference(x_odd, input_lengths, weight, bias)
    out_odd, _ = time_reduction_apply(x_odd, input_lengths, c32, b32)
    out_odd = jax.block_until_ready(out_odd)
    assert out_odd.shape == ref_odd.shape, (out_odd.shape, ref_odd.shape)
    assert np.allclose(np.asarray(out_odd), np.asarray(ref_odd), atol=2e-2, rtol=2e-2)

    print("KERNEL_OK")
</pallas_src>

<mosaic_0001>
module attributes {stable_mosaic.version = 11 : i64} {
  func.func @_time_reduction_kernel(%arg0: i32, %arg1: memref<1x8x32xf32, #tpu.memory_space<vmem>>, %arg2: memref<2x32x7xf32, #tpu.memory_space<vmem>>, %arg3: memref<1xf32, #tpu.memory_space<smem>>, %arg4: memref<1x7x7xf32, #tpu.memory_space<vmem>>) attributes {dimension_semantics = [#tpu.dimension_semantics<parallel>], iteration_bounds = array<i64: 2>, scalar_prefetch = 0 : i64, scratch_operands = 0 : i64, tpu.core_type = #tpu.core_type<tc>, window_params = [{transform_indices = @transform_0, window_bounds = array<i64: 1, 8, 32>}, {pipeline_mode = #tpu.pipeline_mode<synchronous>, transform_indices = @transform_1, window_bounds = array<i64: 2, 32, 7>}, {transform_indices = @transform_2, window_bounds = array<i64: 1>}, {transform_indices = @transform_3, window_bounds = array<i64: 1, 7, 7>}]} {
    %c0 = arith.constant 0 : index
    %c0_0 = arith.constant 0 : index
    %c0_1 = arith.constant 0 : index
    %0 = vector.load %arg2[%c0, %c0_0, %c0_1] : memref<2x32x7xf32, #tpu.memory_space<vmem>>, vector<1x32x7xf32>
    %1 = vector.shape_cast %0 : vector<1x32x7xf32> to vector<32x7xf32>
    %c1 = arith.constant 1 : index
    %c0_2 = arith.constant 0 : index
    %c0_3 = arith.constant 0 : index
    %2 = vector.load %arg2[%c1, %c0_2, %c0_3] : memref<2x32x7xf32, #tpu.memory_space<vmem>>, vector<1x32x7xf32>
    %3 = vector.shape_cast %2 : vector<1x32x7xf32> to vector<32x7xf32>
    %c0_4 = arith.constant 0 : index
    %4 = memref.load %arg3[%c0_4] : memref<1xf32, #tpu.memory_space<smem>>
    %c0_i32 = arith.constant 0 : i32
    %5 = arith.index_cast %c0_i32 : i32 to index
    %c0_5 = arith.constant 0 : index
    %c0_6 = arith.constant 0 : index
    %6 = vector.load %arg1[%5, %c0_5, %c0_6] : memref<1x8x32xf32, #tpu.memory_space<vmem>>, vector<1x7x32xf32>
    %7 = vector.shape_cast %6 : vector<1x7x32xf32> to vector<7x32xf32>
    %8 = arith.index_cast %c0_i32 : i32 to index
    %c1_7 = arith.constant 1 : index
    %c0_8 = arith.constant 0 : index
    %9 = vector.load %arg1[%8, %c1_7, %c0_8] : memref<1x8x32xf32, #tpu.memory_space<vmem>>, vector<1x7x32xf32>
    %10 = vector.shape_cast %9 : vector<1x7x32xf32> to vector<7x32xf32>
    %cst = arith.constant dense<0.000000e+00> : vector<7x7xf32>
    %11 = tpu.matmul %7, %1, %cst {dimension_numbers = #tpu.dot_dimension_numbers<[1], [0], [0], [1], [0, 0, 1, 1], [], []>, precision = #tpu.contract_precision<fp32>} : vector<7x32xf32>, vector<32x7xf32>, vector<7x7xf32> -> vector<7x7xf32>
    %cst_9 = arith.constant dense<0.000000e+00> : vector<7x7xf32>
    %12 = tpu.matmul %10, %3, %cst_9 {dimension_numbers = #tpu.dot_dimension_numbers<[1], [0], [0], [1], [0, 0, 1, 1], [], []>, precision = #tpu.contract_precision<fp32>} : vector<7x32xf32>, vector<32x7xf32>, vector<7x7xf32> -> vector<7x7xf32>
    %13 = arith.addf %11, %12 : vector<7x7xf32>
    %14 = vector.broadcast %4 : f32 to vector<7x7xf32>
    %15 = arith.addf %13, %14 : vector<7x7xf32>
    %16 = arith.negf %15 : vector<7x7xf32>
    %17 = math.exp %16 : vector<7x7xf32>
    %cst_10 = arith.constant 1.000000e+00 : f32
    %18 = vector.broadcast %cst_10 : f32 to vector<7x7xf32>
    %19 = arith.addf %18, %17 : vector<7x7xf32>
    %20 = arith.divf %18, %19 : vector<7x7xf32>
    %21 = arith.mulf %15, %20 : vector<7x7xf32>
    %22 = arith.index_cast %c0_i32 : i32 to index
    %c0_11 = arith.constant 0 : index
    %c0_12 = arith.constant 0 : index
    %23 = vector.load %arg4[%22, %c0_11, %c0_12] : memref<1x7x7xf32, #tpu.memory_space<vmem>>, vector<1x7x7xf32>
    %24 = vector.shape_cast %23 : vector<1x7x7xf32> to vector<7x7xf32>
    %25 = vector.shape_cast %21 : vector<7x7xf32> to vector<1x7x7xf32>
    tpu.vector_store %arg4[%22, %c0_11, %c0_12], %25 {strides = array<i32>} : memref<1x7x7xf32, #tpu.memory_space<vmem>>, vector<1x7x7xf32>,
    %c1_i32 = arith.constant 1 : i32
    return
  }
  func.func @transform_0(%arg0: i32) -> (i32, i32, i32) {
    %c0_i32 = arith.constant 0 : i32
    %c0_i32_0 = arith.constant 0 : i32
    %c0_i32_1 = arith.constant 0 : i32
    return %arg0, %c0_i32, %c0_i32_0 : i32, i32, i32
  }
  func.func @transform_1(%arg0: i32) -> (i32, i32, i32) {
    %c0_i32 = arith.constant 0 : i32
    %c0_i32_0 = arith.constant 0 : i32
    %c0_i32_1 = arith.constant 0 : i32
    %c0_i32_2 = arith.constant 0 : i32
    return %c0_i32, %c0_i32_0, %c0_i32_1 : i32, i32, i32
  }
  func.func @transform_2(%arg0: i32) -> i32 {
    %c0_i32 = arith.constant 0 : i32
    %c0_i32_0 = arith.constant 0 : i32
    return %c0_i32 : i32
  }
  func.func @transform_3(%arg0: i32) -> (i32, i32, i32) {
    %c0_i32 = arith.constant 0 : i32
    %c0_i32_0 = arith.constant 0 : i32
    %c0_i32_1 = arith.constant 0 : i32
    return %arg0, %c0_i32, %c0_i32_0 : i32, i32, i32
  }
}

</mosaic_0001>

<llo_original>
// kernel: tpu_custom_call.1
$region0: #{tpu_custom_call.1}
  #allocation0 [shape = 'u32[]', space=smem, size = 0x4, offset = 0x4, fixed_abs, tag = 'smem constant byte address 0x4 - core index']
  #allocation1 [shape = 'u32[144,128]{1,0:T(1,128)}', space=vmem, size = 0x12000, scoped, tag = 'internal scratch']
  #allocation2 [shape = 'f32[1]{0:T(128)S(6)}', space=smem, size = 0x200, scoped, tag = 'scoped memory for tpu_custom_call.1']
  %s0 = inlined_call_operand.vmem [shape: f32[2,8,32], index: 0, kind: input, shape index: {}]
  %s1 = inlined_call_operand.vmem [shape: f32[2,32,7], index: 1, kind: input, shape index: {}]
  %s2 = inlined_call_operand.<no memory space> [shape: f32[1], index: 2, kind: input, shape index: {}]
  %s3 = inlined_call_operand.vmem [shape: f32[2,7,7], index: 3, kind: output, shape index: {}]
  %s4 = sld [smem:[#allocation0]]
  $region45: #{tpu_custom_call.1} parent=0
    _
  %s6 = ssub.s32 1, %s4
  %s7 = scalar_select 0, %s6, %s4
  %8 = sst [smem:[#allocation2]] %s2
  loop: start=0, step=1, limit=4
  $region2: #{tpu_custom_call.1} parent=0 // loop_pre_header
    _
  $region3: #{tpu_custom_call.1} parent=0 // loop_header
    %s10 = sphi 0, %s14
    %p11 = scmp.ge.s32.totalorder %s10, 4
    %s20 = sphi 0, %s22
    %s23 = sphi 0, %s20
    %s24 = sphi 0, %s23
    %s40 = sphi 0, %s24
    %s44 = sphi 0, %s44
    %s46 = sphi 0, %s44
    %s47 = sphi 0, %s46
    %s61 = sphi 0, %s47
    %s65 = sphi 0, %s65
    %s67 = sphi 0, %s65
    %s68 = sphi 0, %s67
    %s82 = sphi 0, %s68
    %s88 = sphi 0, %s90
    %s91 = sphi 0, %s88
    %s92 = sphi 0, %s91
    %s108 = sphi 0, %s92
  $region4: #{tpu_custom_call.1} parent=0 // loop_header_branch
    %13 = sbr.rel (%p11) target = $region8
  $region5: #{tpu_custom_call.1} parent=0 // loop_body
    %s15 = ssub.s32 %s10, 1
    %s16 = ssub.s32 %s10, 2
    %s17 = sadd.s32 %s10, 1
    %s18 = ssub.s32 %s10, %s17
    %p19 = scmp.eq.s32.totalorder %s18, 0
    %s21 = sadd.s32 %s20, 1
    %s22 = scalar_select %p19, %s20, %s21
    %p25 = pneg %p19
    %p26 = scmp.eq.s32.totalorder %s10, 1
    %p27 = por %p25, %p26
    %p28 = scmp.ne.s32.totalorder %s20, %s23
    %p29 = scmp.eq.s32.totalorder %s10, 0
    %p30 = por %p28, %p29
    %p31 = scmp.ne.s32.totalorder %s20, %s23
    %p32 = scmp.eq.s32.totalorder %s15, 1
    %p33 = por %p31, %p32
    %p34 = scmp.ne.s32.totalorder %s23, %s24
    %p35 = scmp.eq.s32.totalorder %s15, 0
    %p36 = por %p34, %p35
    %p37 = scmp.ne.s32.totalorder %s23, %s24
    %p38 = scmp.eq.s32.totalorder %s16, 1
    %p39 = por %p37, %p38
    %p41 = scmp.ne.s32.totalorder %s24, %s40
    %p42 = scmp.eq.s32.totalorder %s16, 0
    %p43 = por %p41, %p42
    %s45 = sadd.s32 %s44, 1
    %p48 = scmp.eq.s32.totalorder %s10, 1
    %p49 = scmp.ne.s32.totalorder %s44, %s46
    %p50 = scmp.eq.s32.totalorder %s10, 0
    %p51 = por %p49, %p50
    %p52 = scmp.ne.s32.totalorder %s44, %s46
    %p53 = scmp.eq.s32.totalorder %s15, 1
    %p54 = por %p52, %p53
    %p55 = scmp.ne.s32.totalorder %s46, %s47
    %p56 = scmp.eq.s32.totalorder %s15, 0
    %p57 = por %p55, %p56
    %p58 = scmp.ne.s32.totalorder %s46, %s47
    %p59 = scmp.eq.s32.totalorder %s16, 1
    %p60 = por %p58, %p59
    %p62 = scmp.ne.s32.totalorder %s47, %s61
    %p63 = scmp.eq.s32.totalorder %s16, 0
    %p64 = por %p62, %p63
    %s66 = sadd.s32 %s65, 1
    %p69 = scmp.eq.s32.totalorder %s10, 1
    %p70 = scmp.ne.s32.totalorder %s65, %s67
    %p71 = scmp.eq.s32.totalorder %s10, 0
    %p72 = por %p70, %p71
    %p73 = scmp.ne.s32.totalorder %s65, %s67
    %p74 = scmp.eq.s32.totalorder %s15, 1
    %p75 = por %p73, %p74
    %p76 = scmp.ne.s32.totalorder %s67, %s68
    %p77 = scmp.eq.s32.totalorder %s15, 0
    %p78 = por %p76, %p77
    %p79 = scmp.ne.s32.totalorder %s67, %s68
    %p80 = scmp.eq.s32.totalorder %s16, 1
    %p81 = por %p79, %p80
    %p83 = scmp.ne.s32.totalorder %s68, %s82
    %p84 = scmp.eq.s32.totalorder %s16, 0
    %p85 = por %p83, %p84
    %s86 = ssub.s32 %s10, %s17
    %p87 = scmp.eq.s32.totalorder %s86, 0
    %s89 = sadd.s32 %s88, 1
    %s90 = scalar_select %p87, %s88, %s89
    %p93 = pneg %p87
    %p94 = scmp.eq.s32.totalorder %s10, 1
    %p95 = por %p93, %p94
    %p96 = scmp.ne.s32.totalorder %s88, %s91
    %p97 = scmp.eq.s32.totalorder %s10, 0
    %p98 = por %p96, %p97
    %p99 = scmp.ne.s32.totalorder %s88, %s91
    %p100 = scmp.eq.s32.totalorder %s15, 1
    %p101 = por %p99, %p100
    %p102 = scmp.ne.s32.totalorder %s91, %s92
    %p103 = scmp.eq.s32.totalorder %s15, 0
    %p104 = por %p102, %p103
    %p105 = scmp.ne.s32.totalorder %s91, %s92
    %p106 = scmp.eq.s32.totalorder %s16, 1
    %p107 = por %p105, %p106
    %p109 = scmp.ne.s32.totalorder %s92, %s108
    %p110 = scmp.eq.s32.totalorder %s16, 0
    %p111 = por %p109, %p110
    %p112 = scmp.le.s32.totalorder 1, %s10
    %p113 = scmp.lt.s32.totalorder %s10, 3
    %p114 = pnand %p112, %p113
    %p115 = pneg %p114
    // Predicated region
    $region9: #{tpu_custom_call.1} parent=5 // pred_check
      _
    $region10: #{tpu_custom_call.1} parent=5 // pred_check_branch
      %117 = sbr.rel (%p114) target = $region12
    $region11: #{tpu_custom_call.1} parent=5 // pred_region
      %s118 = ssub.s32 %s10, 1
      // Predicated region
      $region13: #{tpu_custom_call.1} parent=11 // pred_check
        %p119 = pneg %p57
      $region14: #{tpu_custom_call.1} parent=11 // pred_check_branch
        %121 = sbr.rel (%p119) target = $region16
      $region15: #{tpu_custom_call.1} parent=11 // pred_region
        _
      $region16: #{tpu_custom_call.1} parent=11 // pred_fallthru
        _
      // Predicated region
      $region17: #{tpu_custom_call.1} parent=11 // pred_check
        %p122 = pneg %p78
      $region18: #{tpu_custom_call.1} parent=11 // pred_check_branch
        %124 = sbr.rel (%p122) target = $region20
      $region19: #{tpu_custom_call.1} parent=11 // pred_region
        _
      $region20: #{tpu_custom_call.1} parent=11 // pred_fallthru
        _
    $region12: #{tpu_custom_call.1} parent=5 // pred_fallthru
      _
    %p125 = scmp.lt.s32.totalorder %s10, 2
    // Predicated region
    $region21: #{tpu_custom_call.1} parent=5 // pred_check
      %p126 = pneg %p125
    $region22: #{tpu_custom_call.1} parent=5 // pred_check_branch
      %128 = sbr.rel (%p126) target = $region24
    $region23: #{tpu_custom_call.1} parent=5 // pred_region
      // Predicated region
      $region25: #{tpu_custom_call.1} parent=23 // pred_check
        %p129 = pneg %p30
      $region26: #{tpu_custom_call.1} parent=23 // pred_check_branch
        %131 = sbr.rel (%p129) target = $region28
      $region27: #{tpu_custom_call.1} parent=23 // pred_region
        %p132 = scmp.lt.s32.totalorder %s10, 1
        %s133 = scalar_select %p132, %s10, 1
        %s134 = smul.addr %s133, 8
        %s135 = scalar_lea.vmem %s0, %s134
      $region28: #{tpu_custom_call.1} parent=23 // pred_fallthru
        _
    $region24: #{tpu_custom_call.1} parent=5 // pred_fallthru
      _
    %p136 = scmp.le.s32.totalorder 1, %s10
    %p137 = scmp.lt.s32.totalorder %s10, 3
    %p138 = pnand %p136, %p137
    %p139 = pneg %p138
    // Predicated region
    $region29: #{tpu_custom_call.1} parent=5 // pred_check
      _
    $region30: #{tpu_custom_call.1} parent=5 // pred_check_branch
      %141 = sbr.rel (%p138) target = $region32
    $region31: #{tpu_custom_call.1} parent=5 // pred_region
      %s142 = ssub.s32 %s10, 1
      %p143 = scmp.lt.s32.totalorder %s15, 1
      %s144 = scalar_select %p143, %s15, 1
      %s145 = smul.addr %s144, 8
      %s146 = scalar_lea.vmem %s0, %s145
      %p147 = pneg %p36
      %p148 = pneg %p33
      %p149 = pneg %p57
      %p150 = pneg %p54
      %p151 = pneg %p78
      %p152 = pneg %p75
      %p153 = pneg %p104
      %p154 = pneg %p101
      %p155 = scmp.lt.s32.totalorder %s15, 1
      %s156 = scalar_select %p155, %s15, 1
      %s157 = smul.addr %s156, 8
      %s158 = scalar_lea.vmem %s3, %s157
      %p159 = scmp.lt.s32.totalorder %s15, 1
      %s160 = scalar_select %p159, %s15, 1
      %s161 = smul.addr %s160, 8
      %s162 = scalar_lea.vmem %s0, %s161
      %p163 = scmp.lt.s32.totalorder %s15, 1
      %s164 = scalar_select %p163, %s15, 1
      %s165 = smul.addr %s164, 8
      %s166 = scalar_lea.vmem %s3, %s165
      %v167 = vld [vmem:[%s1] sm:$0xff]
      %v168 = vld [vmem:[%s1 + $0x8] sm:$0xff]
      %v169 = vld [vmem:[%s1 + $0x10] sm:$0xff]
      %v170 = vld [vmem:[%s1 + $0x18] sm:$0xff]
      %s171 = scalar_lea.vmem %s1, 32
      %v172 = vld [vmem:[%s171] sm:$0xff]
      %v173 = vld [vmem:[%s171 + $0x8] sm:$0xff]
      %v174 = vld [vmem:[%s171 + $0x10] sm:$0xff]
      %v175 = vld [vmem:[%s171 + $0x18] sm:$0xff]
      %s176 = sld [smem:[#allocation2]]
      %v177 = vld [vmem:[%s162] sm:$0x7f]
      %v178 = vld [vmem:[%s162 + $0x1] sm:$0x7f]
      %vm179 = vcmask 261120
      %v181 = vsel %vm179, %v178, 0
      %183 = vmatprep.subr.mxu0 0.0
      %v184 = vand.u32 %v172, 4294901760
      %185 = vmatpush1.msra.mxu0 %v184
      %186 = vmatprep.subr.mxu0 0.0
      %v187 = vand.u32 %v173, 4294901760
      %188 = vmatpush1.msra.mxu0 %v187
      %189 = vmatprep.subr.mxu0 0.0
      %v190 = vand.u32 %v174, 4294901760
      %191 = vmatpush1.msra.mxu0 %v190
      %192 = vmatprep.subr.mxu0 0.0
      %v193 = vand.u32 %v175, 4294901760
      %194 = vmatpush1.msra.mxu0 %v193
      %195 = vmatprep.subr.mxu0 0.0
      %196 = vmatpush1.msra.mxu0 0.0
      %197 = vmatprep.subr.mxu0 0.0
      %198 = vmatpush1.msra.mxu0 0.0
      %199 = vmatprep.subr.mxu0 0.0
      %200 = vmatpush1.msra.mxu0 0.0
      %201 = vmatprep.subr.mxu0 0.0
      %202 = vmatpush1.msra.mxu0 0.0
      %203 = vmatprep.subr.mxu0 0.0
      %204 = vmatpush1.msra.mxu0 0.0
      %205 = vmatprep.subr.mxu0 0.0
      %206 = vmatpush1.msra.mxu0 0.0
      %207 = vmatprep.subr.mxu0 0.0
      %208 = vmatpush1.msra.mxu0 0.0
      %209 = vmatprep.subr.mxu0 0.0
      %210 = vmatpush1.msra.mxu0 0.0
      %211 = vmatprep.subr.mxu0 0.0
      %212 = vmatpush1.msra.mxu0 0.0
      %213 = vmatprep.subr.mxu0 0.0
      %214 = vmatpush1.msra.mxu0 0.0
      %215 = vmatprep.subr.mxu0 0.0
      %216 = vmatpush1.msra.mxu0 0.0
      %217 = vmatprep.subr.mxu0 0.0
      %218 = vmatpush1.msra.mxu0 0.0
      %219 = vmatprep.subr.mxu0 0.0
      %220 = vmatpush1.msra.mxu0 0.0
      %221 = vmatprep.subr.mxu0 0.0
      %222 = vmatpush1.msra.mxu0 0.0
      %223 = vmatprep.subr.mxu0 0.0
      %224 = vmatpush1.msra.mxu0 0.0
      %225 = vmatprep.subr.mxu0 0.0
      %226 = vmatpush1.msra.mxu0 0.0
      %227 = vmatprep.subr.mxu0 0.0
      %228 = vmatpush1.msra.mxu0 0.0
      %229 = vmatprep.subr.mxu0 0.0
      %230 = vmatpush1.msra.mxu0 0.0
      %231 = vmatprep.subr.mxu0 0.0
      %232 = vmatpush1.msra.mxu0 0.0
      %233 = vmatprep.subr.mxu0 0.0
      %234 = vmatpush1.msra.mxu0 0.0
      %235 = vmatprep.subr.mxu0 0.0
      %236 = vmatpush1.msra.mxu0 0.0
      %237 = vmatprep.subr.mxu0 0.0
      %238 = vmatpush1.msra.mxu0 0.0
      %239 = vmatprep.subr.mxu0 0.0
      %240 = vmatpush1.msra.mxu0 0.0
      %241 = vmatprep.subr.mxu0 0.0
      %242 = vmatpush1.msra.mxu0 0.0
      %243 = vmatprep.subr.mxu0 0.0
      %244 = vmatpush1.msra.mxu0 0.0
      %245 = vmatprep.subr.mxu0 0.0
      %246 = vmatpush1.msra.mxu0 0.0
      %247 = vmatprep.subr.mxu0 0.0
      %248 = vmatpush1.msra.mxu0 0.0
      %249 = vmatprep.subr.mxu0 0.0
      %250 = vmatpush1.msra.mxu0 0.0
      %251 = vmatprep.mubr.f32.mxu0 0.0
      %v252 = vand.u32 %v181, 4294901760
      %v253 = vsub.f32 %v181, %v252
      %v254 = vand.u32 %v253, 4294901760
      %v255 = vsub.f32 %v253, %v254
      %v256 = vand.u32 %v255, 4294901760
      %257 = vmatmul.mubr.f32.gmra.mrb[0].mxu0 %v256
      %v258 = vpop.f32.mrb[0].mxu0
      %v259 = vadd.f32 0.0, %v258
      %v260 = vpop.f32.mrb[0].mxu0
      %261 = vdwg.mxu0
      %262 = vmatprep.subr.mxu0 0.0
      %v263 = vand.u32 %v172, 4294901760
      %v264 = vsub.f32 %v172, %v263
      %v265 = vand.u32 %v264, 4294901760
      %v266 = vsub.f32 %v264, %v265
      %v267 = vand.u32 %v266, 4294901760
      %268 = vmatpush1.msra.mxu0 %v267
      %269 = vmatprep.subr.mxu0 0.0
      %v270 = vand.u32 %v173, 4294901760
      %v271 = vsub.f32 %v173, %v270
      %v272 = vand.u32 %v271, 4294901760
      %v273 = vsub.f32 %v271, %v272
      %v274 = vand.u32 %v273, 4294901760
      %275 = vmatpush1.msra.mxu0 %v274
      %276 = vmatprep.subr.mxu0 0.0
      %v277 = vand.u32 %v174, 4294901760
      %v278 = vsub.f32 %v174, %v277
      %v279 = vand.u32 %v278, 4294901760
      %v280 = vsub.f32 %v278, %v279
      %v281 = vand.u32 %v280, 4294901760
      %282 = vmatpush1.msra.mxu0 %v281
      %283 = vmatprep.subr.mxu0 0.0
      %v284 = vand.u32 %v175, 4294901760
      %v285 = vsub.f32 %v175, %v284
      %v286 = vand.u32 %v285, 4294901760
      %v287 = vsub.f32 %v285, %v286
      %v288 = vand.u32 %v287, 4294901760
      %289 = vmatpush1.msra.mxu0 %v288
      %290 = vmatprep.subr.mxu0 0.0
      %291 = vmatpush1.msra.mxu0 0.0
      %292 = vmatprep.subr.mxu0 0.0
      %293 = vmatpush1.msra.mxu0 0.0
      %294 = vmatprep.subr.mxu0 0.0
      %295 = vmatpush1.msra.mxu0 0.0
      %296 = vmatprep.subr.mxu0 0.0
      %297 = vmatpush1.msra.mxu0 0.0
      %298 = vmatprep.subr.mxu0 0.0
      %299 = vmatpush1.msra.mxu0 0.0
      %300 = vmatprep.subr.mxu0 0.0
      %301 = vmatpush1.msra.mxu0 0.0
      %302 = vmatprep.subr.mxu0 0.0
      %303 = vmatpush1.msra.mxu0 0.0
      %304 = vmatprep.subr.mxu0 0.0
      %305 = vmatpush1.msra.mxu0 0.0
      %306 = vmatprep.subr.mxu0 0.0
      %307 = vmatpush1.msra.mxu0 0.0
      %308 = vmatprep.subr.mxu0 0.0
      %309 = vmatpush1.msra.mxu0 0.0
      %310 = vmatprep.subr.mxu0 0.0
      %311 = vmatpush1.msra.mxu0 0.0
      %312 = vmatprep.subr.mxu0 0.0
      %313 = vmatpush1.msra.mxu0 0.0
      %314 = vmatprep.subr.mxu0 0.0
      %315 = vmatpush1.msra.mxu0 0.0
      %316 = vmatprep.subr.mxu0 0.0
      %317 = vmatpush1.msra.mxu0 0.0
      %318 = vmatprep.subr.mxu0 0.0
      %319 = vmatpush1.msra.mxu0 0.0
      %320 = vmatprep.subr.mxu0 0.0
      %321 = vmatpush1.msra.mxu0 0.0
      %322 = vmatprep.subr.mxu0 0.0
      %323 = vmatpush1.msra.mxu0 0.0
      %324 = vmatprep.subr.mxu0 0.0
      %325 = vmatpush1.msra.mxu0 0.0
      %326 = vmatprep.subr.mxu0 0.0
      %327 = vmatpush1.msra.mxu0 0.0
      %328 = vmatprep.subr.mxu0 0.0
      %329 = vmatpush1.msra.mxu0 0.0
      %330 = vmatprep.subr.mxu0 0.0
      %331 = vmatpush1.msra.mxu0 0.0
      %332 = vmatprep.subr.mxu0 0.0
      %333 = vmatpush1.msra.mxu0 0.0
      %334 = vmatprep.subr.mxu0 0.0
      %335 = vmatpush1.msra.mxu0 0.0
      %336 = vmatprep.subr.mxu0 0.0
      %337 = vmatpush1.msra.mxu0 0.0
      %338 = vmatprep.subr.mxu0 0.0
      %339 = vmatpush1.msra.mxu0 0.0
      %340 = vmatprep.subr.mxu0 0.0
      %341 = vmatpush1.msra.mxu0 0.0
      %342 = vmatprep.subr.mxu0 0.0
      %343 = vmatpush1.msra.mxu0 0.0
      %344 = vmatprep.subr.mxu0 0.0
      %345 = vmatpush1.msra.mxu0 0.0
      %346 = vmatprep.mubr.f32.mxu0 0.0
      %v347 = vand.u32 %v181, 4294901760
      %348 = vmatmul.mubr.f32.gmra.mrb[0].mxu0 %v347
      %v349 = vpop.f32.mrb[0].mxu0
      %v350 = vadd.f32 %v259, %v349
      %v351 = vpop.f32.mrb[0].mxu0
      %352 = vdwg.mxu0
      %353 = vmatprep.subr.mxu0 0.0
      %v354 = vand.u32 %v172, 4294901760
      %v355 = vsub.f32 %v172, %v354
      %356 = vmatpush1.msra.mxu0 %v355
      %357 = vmatprep.subr.mxu0 0.0
      %v358 = vand.u32 %v173, 4294901760
      %v359 = vsub.f32 %v173, %v358
      %360 = vmatpush1.msra.mxu0 %v359
      %361 = vmatprep.subr.mxu0 0.0
      %v362 = vand.u32 %v174, 4294901760
      %v363 = vsub.f32 %v174, %v362
      %364 = vmatpush1.msra.mxu0 %v363
      %365 = vmatprep.subr.mxu0 0.0
      %v366 = vand.u32 %v175, 4294901760
      %v367 = vsub.f32 %v175, %v366
      %368 = vmatpush1.msra.mxu0 %v367
      %369 = vmatprep.subr.mxu0 0.0
      %370 = vmatpush1.msra.mxu0 0.0
      %371 = vmatprep.subr.mxu0 0.0
      %372 = vmatpush1.msra.mxu0 0.0
      %373 = vmatprep.subr.mxu0 0.0
      %374 = vmatpush1.msra.mxu0 0.0
      %375 = vmatprep.subr.mxu0 0.0
      %376 = vmatpush1.msra.mxu0 0.0
      %377 = vmatprep.subr.mxu0 0.0
      %378 = vmatpush1.msra.mxu0 0.0
      %379 = vmatprep.subr.mxu0 0.0
      %380 = vmatpush1.msra.mxu0 0.0
      %381 = vmatprep.subr.mxu0 0.0
      %382 = vmatpush1.msra.mxu0 0.0
      %383 = vmatprep.subr.mxu0 0.0
      %384 = vmatpush1.msra.mxu0 0.0
      %385 = vmatprep.subr.mxu0 0.0
      %386 = vmatpush1.msra.mxu0 0.0
      %387 = vmatprep.subr.mxu0 0.0
      %388 = vmatpush1.msra.mxu0 0.0
      %389 = vmatprep.subr.mxu0 0.0
      %390 = vmatpush1.msra.mxu0 0.0
      %391 = vmatprep.subr.mxu0 0.0
      %392 = vmatpush1.msra.mxu0 0.0
      %393 = vmatprep.subr.mxu0 0.0
      %394 = vmatpush1.msra.mxu0 0.0
      %395 = vmatprep.subr.mxu0 0.0
      %396 = vmatpush1.msra.mxu0 0.0
      %397 = vmatprep.subr.mxu0 0.0
      %398 = vmatpush1.msra.mxu0 0.0
      %399 = vmatprep.subr.mxu0 0.0
      %400 = vmatpush1.msra.mxu0 0.0
      %401 = vmatprep.subr.mxu0 0.0
      %402 = vmatpush1.msra.mxu0 0.0
      %403 = vmatprep.subr.mxu0 0.0
      %404 = vmatpush1.msra.mxu0 0.0
      %405 = vmatprep.subr.mxu0 0.0
      %406 = vmatpush1.msra.mxu0 0.0
      %407 = vmatprep.subr.mxu0 0.0
      %408 = vmatpush1.msra.mxu0 0.0
      %409 = vmatprep.subr.mxu0 0.0
      %410 = vmatpush1.msra.mxu0 0.0
      %411 = vmatprep.subr.mxu0 0.0
      %412 = vmatpush1.msra.mxu0 0.0
      %413 = vmatprep.subr.mxu0 0.0
      %414 = vmatpush1.msra.mxu0 0.0
      %415 = vmatprep.subr.mxu0 0.0
      %416 = vmatpush1.msra.mxu0 0.0
      %417 = vmatprep.subr.mxu0 0.0
      %418 = vmatpush1.msra.mxu0 0.0
      %419 = vmatprep.subr.mxu0 0.0
      %420 = vmatpush1.msra.mxu0 0.0
      %421 = vmatprep.subr.mxu0 0.0
      %422 = vmatpush1.msra.mxu0 0.0
      %423 = vmatprep.subr.mxu0 0.0
      %424 = vmatpush1.msra.mxu0 0.0
      %425 = vmatprep.mubr.f32.mxu0 0.0
      %v426 = vand.u32 %v181, 4294901760
      %v427 = vsub.f32 %v181, %v426
      %428 = vmatmul.mubr.f32.gmra.mrb[0].mxu0 %v427
      %v429 = vpop.f32.mrb[0].mxu0
      %v430 = vadd.f32 %v350, %v429
      %v431 = vpop.f32.mrb[0].mxu0
      %432 = vdwg.mxu0
      %433 = vmatprep.subr.mxu0 0.0
      %v434 = vand.u32 %v172, 4294901760
      %435 = vmatpush1.msra.mxu0 %v434
      %436 = vmatprep.subr.mxu0 0.0
      %v437 = vand.u32 %v173, 4294901760
      %438 = vmatpush1.msra.mxu0 %v437
      %439 = vmatprep.subr.mxu0 0.0
      %v440 = vand.u32 %v174, 4294901760
      %441 = vmatpush1.msra.mxu0 %v440
      %442 = vmatprep.subr.mxu0 0.0
      %v443 = vand.u32 %v175, 4294901760
      %444 = vmatpush1.msra.mxu0 %v443
      %445 = vmatprep.subr.mxu0 0.0
      %446 = vmatpush1.msra.mxu0 0.0
      %447 = vmatprep.subr.mxu0 0.0
      %448 = vmatpush1.msra.mxu0 0.0
      %449 = vmatprep.subr.mxu0 0.0
      %450 = vmatpush1.msra.mxu0 0.0
      %451 = vmatprep.subr.mxu0 0.0
      %452 = vmatpush1.msra.mxu0 0.0
      %453 = vmatprep.subr.mxu0 0.0
      %454 = vmatpush1.msra.mxu0 0.0
      %455 = vmatprep.subr.mxu0 0.0
      %456 = vmatpush1.msra.mxu0 0.0
      %457 = vmatprep.subr.mxu0 0.0
      %458 = vmatpush1.msra.mxu0 0.0
      %459 = vmatprep.subr.mxu0 0.0
      %460 = vmatpush1.msra.mxu0 0.0
      %461 = vmatprep.subr.mxu0 0.0
      %462 = vmatpush1.msra.mxu0 0.0
      %463 = vmatprep.subr.mxu0 0.0
      %464 = vmatpush1.msra.mxu0 0.0
      %465 = vmatprep.subr.mxu0 0.0
      %466 = vmatpush1.msra.mxu0 0.0
      %467 = vmatprep.subr.mxu0 0.0
      %468 = vmatpush1.msra.mxu0 0.0
      %469 = vmatprep.subr.mxu0 0.0
      %470 = vmatpush1.msra.mxu0 0.0
      %471 = vmatprep.subr.mxu0 0.0
      %472 = vmatpush1.msra.mxu0 0.0
      %473 = vmatprep.subr.mxu0 0.0
      %474 = vmatpush1.msra.mxu0 0.0
      %475 = vmatprep.subr.mxu0 0.0
      %476 = vmatpush1.msra.mxu0 0.0
      %477 = vmatprep.subr.mxu0 0.0
      %478 = vmatpush1.msra.mxu0 0.0
      %479 = vmatprep.subr.mxu0 0.0
      %480 = vmatpush1.msra.mxu0 0.0
      %481 = vmatprep.subr.mxu0 0.0
      %482 = vmatpush1.msra.mxu0 0.0
      %483 = vmatprep.subr.mxu0 0.0
      %484 = vmatpush1.msra.mxu0 0.0
      %485 = vmatprep.subr.mxu0 0.0
      %486 = vmatpush1.msra.mxu0 0.0
      %487 = vmatprep.subr.mxu0 0.0
      %488 = vmatpush1.msra.mxu0 0.0
      %489 = vmatprep.subr.mxu0 0.0
      %490 = vmatpush1.msra.mxu0 0.0
      %491 = vmatprep.subr.mxu0 0.0
      %492 = vmatpush1.msra.mxu0 0.0
      %493 = vmatprep.subr.mxu0 0.0
      %494 = vmatpush1.msra.mxu0 0.0
      %495 = vmatprep.subr.mxu0 0.0
      %496 = vmatpush1.msra.mxu0 0.0
      %497 = vmatprep.subr.mxu0 0.0
      %498 = vmatpush1.msra.mxu0 0.0
      %499 = vmatprep.subr.mxu0 0.0
      %500 = vmatpush1.msra.mxu0 0.0
      %501 = vmatprep.mubr.f32.mxu0 0.0
      %v502 = vand.u32 %v181, 4294901760
      %v503 = vsub.f32 %v181, %v502
      %v504 = vand.u32 %v503, 4294901760
      %505 = vmatmul.mubr.f32.gmra.mrb[0].mxu0 %v504
      %v506 = vpop.f32.mrb[0].mxu0
      %v507 = vadd.f32 %v430, %v506
      %v508 = vpop.f32.mrb[0].mxu0
      %509 = vdwg.mxu0
      %510 = vmatprep.subr.mxu0 0.0
      %v511 = vand.u32 %v172, 4294901760
      %v512 = vsub.f32 %v172, %v511
      %v513 = vand.u32 %v512, 4294901760
      %514 = vmatpush1.msra.mxu0 %v513
      %515 = vmatprep.subr.mxu0 0.0
      %v516 = vand.u32 %v173, 4294901760
      %v517 = vsub.f32 %v173, %v516
      %v518 = vand.u32 %v517, 4294901760
      %519 = vmatpush1.msra.mxu0 %v518
      %520 = vmatprep.subr.mxu0 0.0
      %v521 = vand.u32 %v174, 4294901760
      %v522 = vsub.f32 %v174, %v521
      %v523 = vand.u32 %v522, 4294901760
      %524 = vmatpush1.msra.mxu0 %v523
      %525 = vmatprep.subr.mxu0 0.0
      %v526 = vand.u32 %v175, 4294901760
      %v527 = vsub.f32 %v175, %v526
      %v528 = vand.u32 %v527, 4294901760
      %529 = vmatpush1.msra.mxu0 %v528
      %530 = vmatprep.subr.mxu0 0.0
      %531 = vmatpush1.msra.mxu0 0.0
      %532 = vmatprep.subr.mxu0 0.0
      %533 = vmatpush1.msra.mxu0 0.0
      %534 = vmatprep.subr.mxu0 0.0
      %535 = vmatpush1.msra.mxu0 0.0
      %536 = vmatprep.subr.mxu0 0.0
      %537 = vmatpush1.msra.mxu0 0.0
      %538 = vmatprep.subr.mxu0 0.0
      %539 = vmatpush1.msra.mxu0 0.0
      %540 = vmatprep.subr.mxu0 0.0
      %541 = vmatpush1.msra.mxu0 0.0
      %542 = vmatprep.subr.mxu0 0.0
      %543 = vmatpush1.msra.mxu0 0.0
      %544 = vmatprep.subr.mxu0 0.0
      %545 = vmatpush1.msra.mxu0 0.0
      %546 = vmatprep.subr.mxu0 0.0
      %547 = vmatpush1.msra.mxu0 0.0
      %548 = vmatprep.subr.mxu0 0.0
      %549 = vmatpush1.msra.mxu0 0.0
      %550 = vmatprep.subr.mxu0 0.0
      %551 = vmatpush1.msra.mxu0 0.0
      %552 = vmatprep.subr.mxu0 0.0
      %553 = vmatpush1.msra.mxu0 0.0
      %554 = vmatprep.subr.mxu0 0.0
      %555 = vmatpush1.msra.mxu0 0.0
      %556 = vmatprep.subr.mxu0 0.0
      %557 = vmatpush1.msra.mxu0 0.0
      %558 = vmatprep.subr.mxu0 0.0
      %559 = vmatpush1.msra.mxu0 0.0
      %560 = vmatprep.subr.mxu0 0.0
      %561 = vmatpush1.msra.mxu0 0.0
      %562 = vmatprep.subr.mxu0 0.0
      %563 = vmatpush1.msra.mxu0 0.0
      %564 = vmatprep.subr.mxu0 0.0
      %565 = vmatpush1.msra.mxu0 0.0
      %566 = vmatprep.subr.mxu0 0.0
      %567 = vmatpush1.msra.mxu0 0.0
      %568 = vmatprep.subr.mxu0 0.0
      %569 = vmatpush1.msra.mxu0 0.0
      %570 = vmatprep.subr.mxu0 0.0
      %571 = vmatpush1.msra.mxu0 0.0
      %572 = vmatprep.subr.mxu0 0.0
      %573 = vmatpush1.msra.mxu0 0.0
      %574 = vmatprep.subr.mxu0 0.0
      %575 = vmatpush1.msra.mxu0 0.0
      %576 = vmatprep.subr.mxu0 0.0
      %577 = vmatpush1.msra.mxu0 0.0
      %578 = vmatprep.subr.mxu0 0.0
      %579 = vmatpush1.msra.mxu0 0.0
      %580 = vmatprep.subr.mxu0 0.0
      %581 = vmatpush1.msra.mxu0 0.0
      %582 = vmatprep.subr.mxu0 0.0
      %583 = vmatpush1.msra.mxu0 0.0
      %584 = vmatprep.subr.mxu0 0.0
      %585 = vmatpush1.msra.mxu0 0.0
      %586 = vmatprep.mubr.f32.mxu0 0.0
      %v587 = vand.u32 %v181, 4294901760
      %588 = vmatmul.mubr.f32.gmra.mrb[0].mxu0 %v587
      %v589 = vpop.f32.mrb[0].mxu0
      %v590 = vadd.f32 %v507, %v589
      %v591 = vpop.f32.mrb[0].mxu0
      %592 = vdwg.mxu0
      %593 = vmatprep.subr.mxu0 0.0
      %v594 = vand.u32 %v172, 4294901760
      %595 = vmatpush1.msra.mxu0 %v594
      %596 = vmatprep.subr.mxu0 0.0
      %v597 = vand.u32 %v173, 4294901760
      %598 = vmatpush1.msra.mxu0 %v597
      %599 = vmatprep.subr.mxu0 0.0
      %v600 = vand.u32 %v174, 4294901760
      %601 = vmatpush1.msra.mxu0 %v600
      %602 = vmatprep.subr.mxu0 0.0
      %v603 = vand.u32 %v175, 4294901760
      %604 = vmatpush1.msra.mxu0 %v603
      %605 = vmatprep.subr.mxu0 0.0
      %606 = vmatpush1.msra.mxu0 0.0
      %607 = vmatprep.subr.mxu0 0.0
      %608 = vmatpush1.msra.mxu0 0.0
      %609 = vmatprep.subr.mxu0 0.0
      %610 = vmatpush1.msra.mxu0 0.0
      %611 = vmatprep.subr.mxu0 0.0
      %612 = vmatpush1.msra.mxu0 0.0
      %613 = vmatprep.subr.mxu0 0.0
      %614 = vmatpush1.msra.mxu0 0.0
      %615 = vmatprep.subr.mxu0 0.0
      %616 = vmatpush1.msra.mxu0 0.0
      %617 = vmatprep.subr.mxu0 0.0
      %618 = vmatpush1.msra.mxu0 0.0
      %619 = vmatprep.subr.mxu0 0.0
      %620 = vmatpush1.msra.mxu0 0.0
      %621 = vmatprep.subr.mxu0 0.0
      %622 = vmatpush1.msra.mxu0 0.0
      %623 = vmatprep.subr.mxu0 0.0
      %624 = vmatpush1.msra.mxu0 0.0
      %625 = vmatprep.subr.mxu0 0.0
      %626 = vmatpush1.msra.mxu0 0.0
      %627 = vmatprep.subr.mxu0 0.0
      %628 = vmatpush1.msra.mxu0 0.0
      %629 = vmatprep.subr.mxu0 0.0
      %630 = vmatpush1.msra.mxu0 0.0
      %631 = vmatprep.subr.mxu0 0.0
      %632 = vmatpush1.msra.mxu0 0.0
      %633 = vmatprep.subr.mxu0 0.0
      %634 = vmatpush1.msra.mxu0 0.0
      %635 = vmatprep.subr.mxu0 0.0
      %636 = vmatpush1.msra.mxu0 0.0
      %637 = vmatprep.subr.mxu0 0.0
      %638 = vmatpush1.msra.mxu0 0.0
      %639 = vmatprep.subr.mxu0 0.0
      %640 = vmatpush1.msra.mxu0 0.0
      %641 = vmatprep.subr.mxu0 0.0
      %642 = vmatpush1.msra.mxu0 0.0
      %643 = vmatprep.subr.mxu0 0.0
      %644 = vmatpush1.msra.mxu0 0.0
      %645 = vmatprep.subr.mxu0 0.0
      %646 = vmatpush1.msra.mxu0 0.0
      %647 = vmatprep.subr.mxu0 0.0
      %648 = vmatpush1.msra.mxu0 0.0
      %649 = vmatprep.subr.mxu0 0.0
      %650 = vmatpush1.msra.mxu0 0.0
      %651 = vmatprep.subr.mxu0 0.0
      %652 = vmatpush1.msra.mxu0 0.0
      %653 = vmatprep.subr.mxu0 0.0
      %654 = vmatpush1.msra.mxu0 0.0
      %655 = vmatprep.subr.mxu0 0.0
      %656 = vmatpush1.msra.mxu0 0.0
      %657 = vmatprep.subr.mxu0 0.0
      %658 = vmatpush1.msra.mxu0 0.0
      %659 = vmatprep.subr.mxu0 0.0
      %660 = vmatpush1.msra.mxu0 0.0
      %661 = vmatprep.mubr.f32.mxu0 0.0
      %v662 = vand.u32 %v181, 4294901760
      %663 = vmatmul.mubr.f32.gmra.mrb[0].mxu0 %v662
      %v664 = vpop.f32.mrb[0].mxu0
      %v665 = vadd.f32 %v590, %v664
      %v666 = vpop.f32.mrb[0].mxu0
      %667 = vdwg.mxu0
      %v669 = vsel %vm179, %v177, 0
      %671 = vmatprep.subr.mxu0 0.0
      %v672 = vand.u32 %v167, 4294901760
      %673 = vmatpush1.msra.mxu0 %v672
      %674 = vmatprep.subr.mxu0 0.0
      %v675 = vand.u32 %v168, 4294901760
      %676 = vmatpush1.msra.mxu0 %v675
      %677 = vmatprep.subr.mxu0 0.0
      %v678 = vand.u32 %v169, 4294901760
      %679 = vmatpush1.msra.mxu0 %v678
      %680 = vmatprep.subr.mxu0 0.0
      %v681 = vand.u32 %v170, 4294901760
      %682 = vmatpush1.msra.mxu0 %v681
      %683 = vmatprep.subr.mxu0 0.0
      %684 = vmatpush1.msra.mxu0 0.0
      %685 = vmatprep.subr.mxu0 0.0
      %686 = vmatpush1.msra.mxu0 0.0
      %687 = vmatprep.subr.mxu0 0.0
      %688 = vmatpush1.msra.mxu0 0.0
      %689 = vmatprep.subr.mxu0 0.0
      %690 = vmatpush1.msra.mxu0 0.0
      %691 = vmatprep.subr.mxu0 0.0
      %692 = vmatpush1.msra.mxu0 0.0
      %693 = vmatprep.subr.mxu0 0.0
      %694 = vmatpush1.msra.mxu0 0.0
      %695 = vmatprep.subr.mxu0 0.0
      %696 = vmatpush1.msra.mxu0 0.0
      %697 = vmatprep.subr.mxu0 0.0
      %698 = vmatpush1.msra.mxu0 0.0
      %699 = vmatprep.subr.mxu0 0.0
      %700 = vmatpush1.msra.mxu0 0.0
      %701 = vmatprep.subr.mxu0 0.0
      %702 = vmatpush1.msra.mxu0 0.0
      %703 = vmatprep.subr.mxu0 0.0
      %704 = vmatpush1.msra.mxu0 0.0
      %705 = vmatprep.subr.mxu0 0.0
      %706 = vmatpush1.msra.mxu0 0.0
      %707 = vmatprep.subr.mxu0 0.0
      %708 = vmatpush1.msra.mxu0 0.0
      %709 = vmatprep.subr.mxu0 0.0
      %710 = vmatpush1.msra.mxu0 0.0
      %711 = vmatprep.subr.mxu0 0.0
      %712 = vmatpush1.msra.mxu0 0.0
      %713 = vmatprep.subr.mxu0 0.0
      %714 = vmatpush1.msra.mxu0 0.0
      %715 = vmatprep.subr.mxu0 0.0
      %716 = vmatpush1.msra.mxu0 0.0
      %717 = vmatprep.subr.mxu0 0.0
      %718 = vmatpush1.msra.mxu0 0.0
      %719 = vmatprep.subr.mxu0 0.0
      %720 = vmatpush1.msra.mxu0 0.0
      %721 = vmatprep.subr.mxu0 0.0
      %722 = vmatpush1.msra.mxu0 0.0
      %723 = vmatprep.subr.mxu0 0.0
      %724 = vmatpush1.msra.mxu0 0.0
      %725 = vmatprep.subr.mxu0 0.0
      %726 = vmatpush1.msra.mxu0 0.0
      %727 = vmatprep.subr.mxu0 0.0
      %728 = vmatpush1.msra.mxu0 0.0
      %729 = vmatprep.subr.mxu0 0.0
      %730 = vmatpush1.msra.mxu0 0.0
      %731 = vmatprep.subr.mxu0 0.0
      %732 = vmatpush1.msra.mxu0 0.0
      %733 = vmatprep.subr.mxu0 0.0
      %734 = vmatpush1.msra.mxu0 0.0
      %735 = vmatprep.subr.mxu0 0.0
      %736 = vmatpush1.msra.mxu0 0.0
      %737 = vmatprep.subr.mxu0 0.0
      %738 = vmatpush1.msra.mxu0 0.0
      %739 = vmatprep.mubr.f32.mxu0 0.0
      %v740 = vand.u32 %v669, 4294901760
      %v741 = vsub.f32 %v669, %v740
      %v742 = vand.u32 %v741, 4294901760
      %v743 = vsub.f32 %v741, %v742
      %v744 = vand.u32 %v743, 4294901760
      %745 = vmatmul.mubr.f32.gmra.mrb[0].mxu0 %v744
      %v746 = vpop.f32.mrb[0].mxu0
      %v747 = vadd.f32 %v665, %v746
      %v748 = vpop.f32.mrb[0].mxu0
      %749 = vdwg.mxu0
      %750 = vmatprep.subr.mxu0 0.0
      %v751 = vand.u32 %v167, 4294901760
      %v752 = vsub.f32 %v167, %v751
      %v753 = vand.u32 %v752, 4294901760
      %v754 = vsub.f32 %v752, %v753
      %v755 = vand.u32 %v754, 4294901760
      %756 = vmatpush1.msra.mxu0 %v755
      %757 = vmatprep.subr.mxu0 0.0
      %v758 = vand.u32 %v168, 4294901760
      %v759 = vsub.f32 %v168, %v758
      %v760 = vand.u32 %v759, 4294901760
      %v761 = vsub.f32 %v759, %v760
      %v762 = vand.u32 %v761, 4294901760
      %763 = vmatpush1.msra.mxu0 %v762
      %764 = vmatprep.subr.mxu0 0.0
      %v765 = vand.u32 %v169, 4294901760
      %v766 = vsub.f32 %v169, %v765
      %v767 = vand.u32 %v766, 4294901760
      %v768 = vsub.f32 %v766, %v767
      %v769 = vand.u32 %v768, 4294901760
      %770 = vmatpush1.msra.mxu0 %v769
      %771 = vmatprep.subr.mxu0 0.0
      %v772 = vand.u32 %v170, 4294901760
      %v773 = vsub.f32 %v170, %v772
      %v774 = vand.u32 %v773, 4294901760
      %v775 = vsub.f32 %v773, %v774
      %v776 = vand.u32 %v775, 4294901760
      %777 = vmatpush1.msra.mxu0 %v776
      %778 = vmatprep.subr.mxu0 0.0
      %779 = vmatpush1.msra.mxu0 0.0
      %780 = vmatprep.subr.mxu0 0.0
      %781 = vmatpush1.msra.mxu0 0.0
      %782 = vmatprep.subr.mxu0 0.0
      %783 = vmatpush1.msra.mxu0 0.0
      %784 = vmatprep.subr.mxu0 0.0
      %785 = vmatpush1.msra.mxu0 0.0
      %786 = vmatprep.subr.mxu0 0.0
      %787 = vmatpush1.msra.mxu0 0.0
      %788 = vmatprep.subr.mxu0 0.0
      %789 = vmatpush1.msra.mxu0 0.0
      %790 = vmatprep.subr.mxu0 0.0
      %791 = vmatpush1.msra.mxu0 0.0
      %792 = vmatprep.subr.mxu0 0.0
      %793 = vmatpush1.msra.mxu0 0.0
      %794 = vmatprep.subr.mxu0 0.0
      %795 = vmatpush1.msra.mxu0 0.0
      %796 = vmatprep.subr.mxu0 0.0
      %797 = vmatpush1.msra.mxu0 0.0
      %798 = vmatprep.subr.mxu0 0.0
      %799 = vmatpush1.msra.mxu0 0.0
      %800 = vmatprep.subr.mxu0 0.0
      %801 = vmatpush1.msra.mxu0 0.0
      %802 = vmatprep.subr.mxu0 0.0
      %803 = vmatpush1.msra.mxu0 0.0
      %804 = vmatprep.subr.mxu0 0.0
      %805 = vmatpush1.msra.mxu0 0.0
      %806 = vmatprep.subr.mxu0 0.0
      %807 = vmatpush1.msra.mxu0 0.0
      %808 = vmatprep.subr.mxu0 0.0
      %809 = vmatpush1.msra.mxu0 0.0
      %810 = vmatprep.subr.mxu0 0.0
      %811 = vmatpush1.msra.mxu0 0.0
      %812 = vmatprep.subr.mxu0 0.0
      %813 = vmatpush1.msra.mxu0 0.0
      %814 = vmatprep.subr.mxu0 0.0
      %815 = vmatpush1.msra.mxu0 0.0
      %816 = vmatprep.subr.mxu0 0.0
      %817 = vmatpush1.msra.mxu0 0.0
      %818 = vmatprep.subr.mxu0 0.0
      %819 = vmatpush1.msra.mxu0 0.0
      %820 = vmatprep.subr.mxu0 0.0
      %821 = vmatpush1.msra.mxu0 0.0
      %822 = vmatprep.subr.mxu0 0.0
      %823 = vmatpush1.msra.mxu0 0.0
      %824 = vmatprep.subr.mxu0 0.0
      %825 = vmatpush1.msra.mxu0 0.0
      %826 = vmatprep.subr.mxu0 0.0
      %827 = vmatpush1.msra.mxu0 0.0
      %828 = vmatprep.subr.mxu0 0.0
      %829 = vmatpush1.msra.mxu0 0.0
      %830 = vmatprep.subr.mxu0 0.0
      %831 = vmatpush1.msra.mxu0 0.0
      %832 = vmatprep.subr.mxu0 0.0
      %833 = vmatpush1.msra.mxu0 0.0
      %834 = vmatprep.mubr.f32.mxu0 0.0
      %v835 = vand.u32 %v669, 4294901760
      %836 = vmatmul.mubr.f32.gmra.mrb[0].mxu0 %v835
      %v837 = vpop.f32.mrb[0].mxu0
      %v838 = vadd.f32 %v747, %v837
      %v839 = vpop.f32.mrb[0].mxu0
      %840 = vdwg.mxu0
      %841 = vmatprep.subr.mxu0 0.0
      %v842 = vand.u32 %v167, 4294901760
      %v843 = vsub.f32 %v167, %v842
      %844 = vmatpush1.msra.mxu0 %v843
      %845 = vmatprep.subr.mxu0 0.0
      %v846 = vand.u32 %v168, 4294901760
      %v847 = vsub.f32 %v168, %v846
      %848 = vmatpush1.msra.mxu0 %v847
      %849 = vmatprep.subr.mxu0 0.0
      %v850 = vand.u32 %v169, 4294901760
      %v851 = vsub.f32 %v169, %v850
      %852 = vmatpush1.msra.mxu0 %v851
      %853 = vmatprep.subr.mxu0 0.0
      %v854 = vand.u32 %v170, 4294901760
      %v855 = vsub.f32 %v170, %v854
      %856 = vmatpush1.msra.mxu0 %v855
      %857 = vmatprep.subr.mxu0 0.0
      %858 = vmatpush1.msra.mxu0 0.0
      %859 = vmatprep.subr.mxu0 0.0
      %860 = vmatpush1.msra.mxu0 0.0
      %861 = vmatprep.subr.mxu0 0.0
      %862 = vmatpush1.msra.mxu0 0.0
      %863 = vmatprep.subr.mxu0 0.0
      %864 = vmatpush1.msra.mxu0 0.0
      %865 = vmatprep.subr.mxu0 0.0
      %866 = vmatpush1.msra.mxu0 0.0
      %867 = vmatprep.subr.mxu0 0.0
      %868 = vmatpush1.msra.mxu0 0.0
      %869 = vmatprep.subr.mxu0 0.0
      %870 = vmatpush1.msra.mxu0 0.0
      %871 = vmatprep.subr.mxu0 0.0
      %872 = vmatpush1.msra.mxu0 0.0
      %873 = vmatprep.subr.mxu0 0.0
      %874 = vmatpush1.msra.mxu0 0.0
      %875 = vmatprep.subr.mxu0 0.0
      %876 = vmatpush1.msra.mxu0 0.0
      %877 = vmatprep.subr.mxu0 0.0
      %878 = vmatpush1.msra.mxu0 0.0
      %879 = vmatprep.subr.mxu0 0.0
      %880 = vmatpush1.msra.mxu0 0.0
      %881 = vmatprep.subr.mxu0 0.0
      %882 = vmatpush1.msra.mxu0 0.0
      %883 = vmatprep.subr.mxu0 0.0
      %884 = vmatpush1.msra.mxu0 0.0
      %885 = vmatprep.subr.mxu0 0.0
      %886 = vmatpush1.msra.mxu0 0.0
      %887 = vmatprep.subr.mxu0 0.0
      %888 = vmatpush1.msra.mxu0 0.0
      %889 = vmatprep.subr.mxu0 0.0
      %890 = vmatpush1.msra.mxu0 0.0
      %891 = vmatprep.subr.mxu0 0.0
      %892 = vmatpush1.msra.mxu0 0.0
      %893 = vmatprep.subr.mxu0 0.0
      %894 = vmatpush1.msra.mxu0 0.0
      %895 = vmatprep.subr.mxu0 0.0
      %896 = vmatpush1.msra.mxu0 0.0
      %897 = vmatprep.subr.mxu0 0.0
      %898 = vmatpush1.msra.mxu0 0.0
      %899 = vmatprep.subr.mxu0 0.0
      %900 = vmatpush1.msra.mxu0 0.0
      %901 = vmatprep.subr.mxu0 0.0
      %902 = vmatpush1.msra.mxu0 0.0
      %903 = vmatprep.subr.mxu0 0.0
      %904 = vmatpush1.msra.mxu0 0.0
      %905 = vmatprep.subr.mxu0 0.0
      %906 = vmatpush1.msra.mxu0 0.0
      %907 = vmatprep.subr.mxu0 0.0
      %908 = vmatpush1.msra.mxu0 0.0
      %909 = vmatprep.subr.mxu0 0.0
      %910 = vmatpush1.msra.mxu0 0.0
      %911 = vmatprep.subr.mxu0 0.0
      %912 = vmatpush1.msra.mxu0 0.0
      %913 = vmatprep.mubr.f32.mxu0 0.0
      %v914 = vand.u32 %v669, 4294901760
      %v915 = vsub.f32 %v669, %v914
      %916 = vmatmul.mubr.f32.gmra.mrb[0].mxu0 %v915
      %v917 = vpop.f32.mrb[0].mxu0
      %v918 = vadd.f32 %v838, %v917
      %v919 = vpop.f32.mrb[0].mxu0
      %920 = vdwg.mxu0
      %921 = vmatprep.subr.mxu0 0.0
      %v922 = vand.u32 %v167, 4294901760
      %923 = vmatpush1.msra.mxu0 %v922
      %924 = vmatprep.subr.mxu0 0.0
      %v925 = vand.u32 %v168, 4294901760
      %926 = vmatpush1.msra.mxu0 %v925
      %927 = vmatprep.subr.mxu0 0.0
      %v928 = vand.u32 %v169, 4294901760
      %929 = vmatpush1.msra.mxu0 %v928
      %930 = vmatprep.subr.mxu0 0.0
      %v931 = vand.u32 %v170, 4294901760
      %932 = vmatpush1.msra.mxu0 %v931
      %933 = vmatprep.subr.mxu0 0.0
      %934 = vmatpush1.msra.mxu0 0.0
      %935 = vmatprep.subr.mxu0 0.0
      %936 = vmatpush1.msra.mxu0 0.0
      %937 = vmatprep.subr.mxu0 0.0
      %938 = vmatpush1.msra.mxu0 0.0
      %939 = vmatprep.subr.mxu0 0.0
      %940 = vmatpush1.msra.mxu0 0.0
      %941 = vmatprep.subr.mxu0 0.0
      %942 = vmatpush1.msra.mxu0 0.0
      %943 = vmatprep.subr.mxu0 0.0
      %944 = vmatpush1.msra.mxu0 0.0
      %945 = vmatprep.subr.mxu0 0.0
      %946 = vmatpush1.msra.mxu0 0.0
      %947 = vmatprep.subr.mxu0 0.0
      %948 = vmatpush1.msra.mxu0 0.0
      %949 = vmatprep.subr.mxu0 0.0
      %950 = vmatpush1.msra.mxu0 0.0
      %951 = vmatprep.subr.mxu0 0.0
      %952 = vmatpush1.msra.mxu0 0.0
      %953 = vmatprep.subr.mxu0 0.0
      %954 = vmatpush1.msra.mxu0 0.0
      %955 = vmatprep.subr.mxu0 0.0
      %956 = vmatpush1.msra.mxu0 0.0
      %957 = vmatprep.subr.mxu0 0.0
      %958 = vmatpush1.msra.mxu0 0.0
      %959 = vmatprep.subr.mxu0 0.0
      %960 = vmatpush1.msra.mxu0 0.0
      %961 = vmatprep.subr.mxu0 0.0
      %962 = vmatpush1.msra.mxu0 0.0
      %963 = vmatprep.subr.mxu0 0.0
      %964 = vmatpush1.msra.mxu0 0.0
      %965 = vmatprep.subr.mxu0 0.0
      %966 = vmatpush1.msra.mxu0 0.0
      %967 = vmatprep.subr.mxu0 0.0
      %968 = vmatpush1.msra.mxu0 0.0
      %969 = vmatprep.subr.mxu0 0.0
      %970 = vmatpush1.msra.mxu0 0.0
      %971 = vmatprep.subr.mxu0 0.0
      %972 = vmatpush1.msra.mxu0 0.0
      %973 = vmatprep.subr.mxu0 0.0
      %974 = vmatpush1.msra.mxu0 0.0
      %975 = vmatprep.subr.mxu0 0.0
      %976 = vmatpush1.msra.mxu0 0.0
      %977 = vmatprep.subr.mxu0 0.0
      %978 = vmatpush1.msra.mxu0 0.0
      %979 = vmatprep.subr.mxu0 0.0
      %980 = vmatpush1.msra.mxu0 0.0
      %981 = vmatprep.subr.mxu0 0.0
      %982 = vmatpush1.msra.mxu0 0.0
      %983 = vmatprep.subr.mxu0 0.0
      %984 = vmatpush1.msra.mxu0 0.0
      %985 = vmatprep.subr.mxu0 0.0
      %986 = vmatpush1.msra.mxu0 0.0
      %987 = vmatprep.subr.mxu0 0.0
      %988 = vmatpush1.msra.mxu0 0.0
      %989 = vmatprep.mubr.f32.mxu0 0.0
      %v990 = vand.u32 %v669, 4294901760
      %v991 = vsub.f32 %v669, %v990
      %v992 = vand.u32 %v991, 4294901760
      %993 = vmatmul.mubr.f32.gmra.mrb[0].mxu0 %v992
      %v994 = vpop.f32.mrb[0].mxu0
      %v995 = vadd.f32 %v918, %v994
      %v996 = vpop.f32.mrb[0].mxu0
      %997 = vdwg.mxu0
      %998 = vmatprep.subr.mxu0 0.0
      %v999 = vand.u32 %v167, 4294901760
      %v1000 = vsub.f32 %v167, %v999
      %v1001 = vand.u32 %v1000, 4294901760
      %1002 = vmatpush1.msra.mxu0 %v1001
      %1003 = vmatprep.subr.mxu0 0.0
      %v1004 = vand.u32 %v168, 4294901760
      %v1005 = vsub.f32 %v168, %v1004
      %v1006 = vand.u32 %v1005, 4294901760
      %1007 = vmatpush1.msra.mxu0 %v1006
      %1008 = vmatprep.subr.mxu0 0.0
      %v1009 = vand.u32 %v169, 4294901760
      %v1010 = vsub.f32 %v169, %v1009
      %v1011 = vand.u32 %v1010, 4294901760
      %1012 = vmatpush1.msra.mxu0 %v1011
      %1013 = vmatprep.subr.mxu0 0.0
      %v1014 = vand.u32 %v170, 4294901760
      %v1015 = vsub.f32 %v170, %v1014
      %v1016 = vand.u32 %v1015, 4294901760
      %1017 = vmatpush1.msra.mxu0 %v1016
      %1018 = vmatprep.subr.mxu0 0.0
      %1019 = vmatpush1.msra.mxu0 0.0
      %1020 = vmatprep.subr.mxu0 0.0
      %1021 = vmatpush1.msra.mxu0 0.0
      %1022 = vmatprep.subr.mxu0 0.0
      %1023 = vmatpush1.msra.mxu0 0.0
      %1024 = vmatprep.subr.mxu0 0.0
      %1025 = vmatpush1.msra.mxu0 0.0
      %1026 = vmatprep.subr.mxu0 0.0
      %1027 = vmatpush1.msra.mxu0 0.0
      %1028 = vmatprep.subr.mxu0 0.0
      %1029 = vmatpush1.msra.mxu0 0.0
      %1030 = vmatprep.subr.mxu0 0.0
      %1031 = vmatpush1.msra.mxu0 0.0
      %1032 = vmatprep.subr.mxu0 0.0
      %1033 = vmatpush1.msra.mxu0 0.0
      %1034 = vmatprep.subr.mxu0 0.0
      %1035 = vmatpush1.msra.mxu0 0.0
      %1036 = vmatprep.subr.mxu0 0.0
      %1037 = vmatpush1.msra.mxu0 0.0
      %1038 = vmatprep.subr.mxu0 0.0
      %1039 = vmatpush1.msra.mxu0 0.0
      %1040 = vmatprep.subr.mxu0 0.0
      %1041 = vmatpush1.msra.mxu0 0.0
      %1042 = vmatprep.subr.mxu0 0.0
      %1043 = vmatpush1.msra.mxu0 0.0
      %1044 = vmatprep.subr.mxu0 0.0
      %1045 = vmatpush1.msra.mxu0 0.0
      %1046 = vmatprep.subr.mxu0 0.0
      %1047 = vmatpush1.msra.mxu0 0.0
      %1048 = vmatprep.subr.mxu0 0.0
      %1049 = vmatpush1.msra.mxu0 0.0
      %1050 = vmatprep.subr.mxu0 0.0
      %1051 = vmatpush1.msra.mxu0 0.0
      %1052 = vmatprep.subr.mxu0 0.0
      %1053 = vmatpush1.msra.mxu0 0.0
      %1054 = vmatprep.subr.mxu0 0.0
      %1055 = vmatpush1.msra.mxu0 0.0
      %1056 = vmatprep.subr.mxu0 0.0
      %1057 = vmatpush1.msra.mxu0 0.0
      %1058 = vmatprep.subr.mxu0 0.0
      %1059 = vmatpush1.msra.mxu0 0.0
      %1060 = vmatprep.subr.mxu0 0.0
      %1061 = vmatpush1.msra.mxu0 0.0
      %1062 = vmatprep.subr.mxu0 0.0
      %1063 = vmatpush1.msra.mxu0 0.0
      %1064 = vmatprep.subr.mxu0 0.0
      %1065 = vmatpush1.msra.mxu0 0.0
      %1066 = vmatprep.subr.mxu0 0.0
      %1067 = vmatpush1.msra.mxu0 0.0
      %1068 = vmatprep.subr.mxu0 0.0
      %1069 = vmatpush1.msra.mxu0 0.0
      %1070 = vmatprep.subr.mxu0 0.0
      %1071 = vmatpush1.msra.mxu0 0.0
      %1072 = vmatprep.subr.mxu0 0.0
      %1073 = vmatpush1.msra.mxu0 0.0
      %1074 = vmatprep.mubr.f32.mxu0 0.0
      %v1075 = vand.u32 %v669, 4294901760
      %1076 = vmatmul.mubr.f32.gmra.mrb[0].mxu0 %v1075
      %v1077 = vpop.f32.mrb[0].mxu0
      %v1078 = vadd.f32 %v995, %v1077
      %v1079 = vpop.f32.mrb[0].mxu0
      %1080 = vdwg.mxu0
      %1081 = vmatprep.subr.mxu0 0.0
      %v1082 = vand.u32 %v167, 4294901760
      %1083 = vmatpush1.msra.mxu0 %v1082
      %1084 = vmatprep.subr.mxu0 0.0
      %v1085 = vand.u32 %v168, 4294901760
      %1086 = vmatpush1.msra.mxu0 %v1085
      %1087 = vmatprep.subr.mxu0 0.0
      %v1088 = vand.u32 %v169, 4294901760
      %1089 = vmatpush1.msra.mxu0 %v1088
      %1090 = vmatprep.subr.mxu0 0.0
      %v1091 = vand.u32 %v170, 4294901760
      %1092 = vmatpush1.msra.mxu0 %v1091
      %1093 = vmatprep.subr.mxu0 0.0
      %1094 = vmatpush1.msra.mxu0 0.0
      %1095 = vmatprep.subr.mxu0 0.0
      %1096 = vmatpush1.msra.mxu0 0.0
      %1097 = vmatprep.subr.mxu0 0.0
      %1098 = vmatpush1.msra.mxu0 0.0
      %1099 = vmatprep.subr.mxu0 0.0
      %1100 = vmatpush1.msra.mxu0 0.0
      %1101 = vmatprep.subr.mxu0 0.0
      %1102 = vmatpush1.msra.mxu0 0.0
      %1103 = vmatprep.subr.mxu0 0.0
      %1104 = vmatpush1.msra.mxu0 0.0
      %1105 = vmatprep.subr.mxu0 0.0
      %1106 = vmatpush1.msra.mxu0 0.0
      %1107 = vmatprep.subr.mxu0 0.0
      %1108 = vmatpush1.msra.mxu0 0.0
      %1109 = vmatprep.subr.mxu0 0.0
      %1110 = vmatpush1.msra.mxu0 0.0
      %1111 = vmatprep.subr.mxu0 0.0
      %1112 = vmatpush1.msra.mxu0 0.0
      %1113 = vmatprep.subr.mxu0 0.0
      %1114 = vmatpush1.msra.mxu0 0.0
      %1115 = vmatprep.subr.mxu0 0.0
      %1116 = vmatpush1.msra.mxu0 0.0
      %1117 = vmatprep.subr.mxu0 0.0
      %1118 = vmatpush1.msra.mxu0 0.0
      %1119 = vmatprep.subr.mxu0 0.0
      %1120 = vmatpush1.msra.mxu0 0.0
      %1121 = vmatprep.subr.mxu0 0.0
      %1122 = vmatpush1.msra.mxu0 0.0
      %1123 = vmatprep.subr.mxu0 0.0
      %1124 = vmatpush1.msra.mxu0 0.0
      %1125 = vmatprep.subr.mxu0 0.0
      %1126 = vmatpush1.msra.mxu0 0.0
      %1127 = vmatprep.subr.mxu0 0.0
      %1128 = vmatpush1.msra.mxu0 0.0
      %1129 = vmatprep.subr.mxu0 0.0
      %1130 = vmatpush1.msra.mxu0 0.0
      %1131 = vmatprep.subr.mxu0 0.0
      %1132 = vmatpush1.msra.mxu0 0.0
      %1133 = vmatprep.subr.mxu0 0.0
      %1134 = vmatpush1.msra.mxu0 0.0
      %1135 = vmatprep.subr.mxu0 0.0
      %1136 = vmatpush1.msra.mxu0 0.0
      %1137 = vmatprep.subr.mxu0 0.0
      %1138 = vmatpush1.msra.mxu0 0.0
      %1139 = vmatprep.subr.mxu0 0.0
      %1140 = vmatpush1.msra.mxu0 0.0
      %1141 = vmatprep.subr.mxu0 0.0
      %1142 = vmatpush1.msra.mxu0 0.0
      %1143 = vmatprep.subr.mxu0 0.0
      %1144 = vmatpush1.msra.mxu0 0.0
      %1145 = vmatprep.subr.mxu0 0.0
      %1146 = vmatpush1.msra.mxu0 0.0
      %1147 = vmatprep.subr.mxu0 0.0
      %1148 = vmatpush1.msra.mxu0 0.0
      %1149 = vmatprep.mubr.f32.mxu0 0.0
      %v1150 = vand.u32 %v669, 4294901760
      %1151 = vmatmul.mubr.f32.gmra.mrb[0].mxu0 %v1150
      %v1152 = vpop.f32.mrb[0].mxu0
      %v1153 = vadd.f32 %v1078, %v1152
      %v1154 = vpop.f32.mrb[0].mxu0
      %1155 = vdwg.mxu0
      %v1156 = vstv %s176
      %v1157 = vadd.f32 %v1153, %v1156
      %v1158 = vxor.u32 %v1157, 2147483648
      %v1159 = vmul.f32 %v1158, 1.442695
      %v1160 = vpow.pop %v1159
      %v1161 = vadd.f32 %v1160, 1.0
      %v1162 = vrcp.pop %v1161
      %v1163 = vmul.f32 1.0, %v1162
      %v1164 = vmul.f32 %v1157, %v1163
      %vm1165 = vcmask 55296
      %1166 = vst.msk [vmem:[%s166] sm:$0x7f] %vm1165, %v1164
      %p1167 = scmp.lt.s32.totalorder %s15, 1
      %s1168 = scalar_select %p1167, %s15, 1
      %s1169 = smul.addr %s1168, 8
      %s1170 = scalar_lea.vmem %s3, %s1169
      // Predicated region
      $region33: #{tpu_custom_call.1} parent=31 // pred_check
        %p1171 = pneg %p101
      $region34: #{tpu_custom_call.1} parent=31 // pred_check_branch
        %1173 = sbr.rel (%p1171) target = $region36
      $region35: #{tpu_custom_call.1} parent=31 // pred_region
        _
      $region36: #{tpu_custom_call.1} parent=31 // pred_fallthru
        _
    $region32: #{tpu_custom_call.1} parent=5 // pred_fallthru
      _
    %p1174 = scmp.le.s32.totalorder 2, %s10
    // Predicated region
    $region37: #{tpu_custom_call.1} parent=5 // pred_check
      %p1175 = pneg %p1174
    $region38: #{tpu_custom_call.1} parent=5 // pred_check_branch
      %1177 = sbr.rel (%p1175) target = $region40
    $region39: #{tpu_custom_call.1} parent=5 // pred_region
      %s1178 = ssub.s32 %s10, 2
      // Predicated region
      $region41: #{tpu_custom_call.1} parent=39 // pred_check
        %p1179 = pneg %p107
      $region42: #{tpu_custom_call.1} parent=39 // pred_check_branch
        %1181 = sbr.rel (%p1179) target = $region44
      $region43: #{tpu_custom_call.1} parent=39 // pred_region
        %p1182 = scmp.lt.s32.totalorder %s16, 1
        %s1183 = scalar_select %p1182, %s16, 1
        %s1184 = smul.addr %s1183, 8
        %s1185 = scalar_lea.vmem %s3, %s1184
      $region44: #{tpu_custom_call.1} parent=39 // pred_fallthru
        _
    $region40: #{tpu_custom_call.1} parent=5 // pred_fallthru
      _
  $region6: #{tpu_custom_call.1} parent=0 // loop_footer
    %s14 = sadd.s32 1, %s10
  $region7: #{tpu_custom_call.1} parent=0 // loop_footer_branch
    %9 = sbr.rel target = $region3
  $region8: #{tpu_custom_call.1} parent=0 // loop_exit
    _

</llo_original>
